<compile_context>
chip_gen: v6e
topology: v6e:2x2x1
jax: 0.10.0
libtpu: 0.0.40
codegen_flags: <defaults>
</compile_context>

<pallas_src>
import jax
import jax.numpy as jnp
from jax.experimental import pallas as pl
from jax.experimental.pallas import tpu as pltpu


def _round_up(x, m):
    return (x + m - 1) // m * m


# ----------------------------------------------------------------------------
# Kernel
# ----------------------------------------------------------------------------
def _make_feature_embedder_kernel(n_cat, v_pad, offsets, feature_dim, fold):
    offsets = tuple(int(o) for o in offsets)

    def kernel(x_ref, mcat_ref, mnum_ref, bias_ref, out_ref):
        tile = x_ref.shape[0]
        wdt = mcat_ref.dtype

        # Numeric branch: feed the raw (tile, F) block to the MXU; the first
        # n_cat rows of mnum are zero, so the category-id columns contribute 0.
        acc = jnp.dot(
            x_ref[...].astype(wdt), mnum_ref[...], preferred_element_type=jnp.float32
        )

        # Combined multi-hot over all categorical columns with one 128-lane
        # iota.  Static vocab offsets make the ranges disjoint, so OR == sum.
        iota = jax.lax.broadcasted_iota(jnp.int32, (tile, v_pad), 1)
        hits = (x_ref[:, 0:1].astype(jnp.int32) + offsets[0]) == iota
        for i in range(1, n_cat):
            hits = hits | ((x_ref[:, i : i + 1].astype(jnp.int32) + offsets[i]) == iota)
        onehot = hits.astype(wdt)

        # Categorical branch (all embedding tables pre-folded into W_out).
        # TODO(synk): on v6e/v7x the two dots could merge into one K=v_pad+F dot
        # (stacked weights + lane-concat operand); kept separate for robust lowering.
        acc = acc + jnp.dot(onehot, mcat_ref[...], preferred_element_type=jnp.float32)

        result = acc + bias_ref[...]  # (tile, feature_dim) f32
        if fold > 1:
            # Lane-dense store: (tile, 64) f32 row-major == (tile/2, 128); the
            # relayout uses the idle XLU and avoids masked partial stores.
            out_ref[...] = result.reshape(tile // fold, feature_dim * fold)
        else:
            out_ref[...] = result

    return kernel


# ----------------------------------------------------------------------------
# Wrapper
# ----------------------------------------------------------------------------
def feature_embedder_forward(
    x, params, cat_vocabs, cat_dims, num_dim, feature_dim, tile_n=4096, use_bf16=False
):
    """x: [B, S, n_cat + num_dim] float32. Returns [B, S, feature_dim] float32."""
    n_cat = len(cat_vocabs)
    B, S, F = x.shape
    assert F == n_cat + num_dim
    N = B * S
    cat_out_dim = sum(cat_dims)

    x2 = x.reshape(N, F)  # the ONE row-tiled kernel input (no slice/cast/pad passes)

    emb_tables = params["emb_tables"]
    w_num, b_num = params["w_num"], params["b_num"]
    w_out, b_out = params["w_out"], params["b_out"]

    # ---- fold the linear algebra once (cheap, by XLA outside the kernel) ----
    w_out_num = w_out[cat_out_dim:, :]
    m_num = w_num @ w_out_num                                # (num_dim, feature_dim)
    b_fused = b_out + b_num @ w_out_num                      # (1, feature_dim)
    # Prepend n_cat zero rows so the whole raw feature block can be the LHS.
    m_num_full = jnp.concatenate(
        [jnp.zeros((n_cat, feature_dim), m_num.dtype), m_num], axis=0
    )                                                        # (F, feature_dim)

    blocks, offsets = [], []
    col_off = voc_off = 0
    for i in range(n_cat):
        blocks.append(emb_tables[i] @ w_out[col_off : col_off + cat_dims[i], :])
        offsets.append(voc_off)
        col_off += cat_dims[i]
        voc_off += cat_vocabs[i]
    v_total = voc_off
    v_pad = _round_up(v_total, 128)                          # one lane width
    m_cat = jnp.pad(jnp.concatenate(blocks, axis=0), ((0, v_pad - v_total), (0, 0)))

    if use_bf16:
        # Halves weight residency / one-hot vreg pressure, hits the v6e/v7x bf16
        # MXU path.  NOTE: ~1e-3 relative error vs the f32 reference.
        m_cat = m_cat.astype(jnp.bfloat16)
        m_num_full = m_num_full.astype(jnp.bfloat16)

    def _run(fold):
        # ---- row tiling: no full-array pad; the grid clips the ragged tail ----
        row_q = 8 * fold
        tile = min(_round_up(tile_n, row_q), _round_up(N, row_q))
        # v7x megacore hygiene: keep >= 2 grid steps while tiles stay large.
        half = _round_up(pl.cdiv(N, 2), row_q)
        if 1024 <= half < tile:
            tile = half
        grid = pl.cdiv(N, tile)
        out_rows = grid * tile                                # >= N; tail sliced off

        # per-step VMEM estimate (lane-padded, double-buffered)
        def lane(n):
            return _round_up(n, 128)

        est = 2 * tile * lane(F) * 4
        est += 2 * (tile // fold) * lane(feature_dim * fold) * 4
        est += 2 * (v_pad + _round_up(F, 8) + 8) * lane(feature_dim) * 4
        cp = dict(dimension_semantics=("parallel",))
        if est > 14 * 1024 * 1024:  # v5e scoped VMEM default is 16 MiB
            cp["vmem_limit_bytes"] = min(int(est * 3 // 2), 96 * 1024 * 1024)

        kernel = _make_feature_embedder_kernel(n_cat, v_pad, offsets, feature_dim, fold)
        out_slab = pl.pallas_call(
            kernel,
            out_shape=jax.ShapeDtypeStruct(
                (out_rows // fold, feature_dim * fold), jnp.float32
            ),
            grid=(grid,),
            in_specs=[
                pl.BlockSpec((tile, F), lambda i: (i, 0)),              # raw features
                pl.BlockSpec((v_pad, feature_dim), lambda i: (0, 0)),   # M_cat (resident)
                pl.BlockSpec((F, feature_dim), lambda i: (0, 0)),       # M_num (resident)
                pl.BlockSpec((1, feature_dim), lambda i: (0, 0)),       # fused bias
            ],
            out_specs=pl.BlockSpec(
                (tile // fold, feature_dim * fold), lambda i: (i, 0)
            ),
            compiler_params=pltpu.CompilerParams(**cp),
        )(x2, m_cat, m_num_full, b_fused)
        return out_slab.reshape(out_rows, feature_dim)

    # Lane-dense output fold factor (2 for feature_dim=64).
    fold = 128 // feature_dim if (feature_dim < 128 and 128 % feature_dim == 0) else 1
    try:
        out = _run(fold)
    except Exception:  # lowering fallback: plain (tile, feature_dim) store
        if fold == 1:
            raise
        out = _run(1)

    return out[:N].reshape(B, S, feature_dim)


# ----------------------------------------------------------------------------
# Pure-JAX reference (mirrors the PyTorch forward exactly)
# ----------------------------------------------------------------------------
def feature_embedder_reference(x, params, cat_vocabs, cat_dims, num_dim, feature_dim):
    n_cat = len(cat_vocabs)
    cat_x = x[..., :n_cat].astype(jnp.int32)
    num_x = x[..., n_cat:]
    embs = []
    for i in range(n_cat):
        embs.append(params["emb_tables"][i][cat_x[..., i]])
    cat_emb = jnp.concatenate(embs, axis=-1)
    num_emb = num_x @ params["w_num"] + params["b_num"][0]
    out = jnp.concatenate([cat_emb, num_emb], axis=-1)
    return out @ params["w_out"] + params["b_out"][0]


# ----------------------------------------------------------------------------
# Main
# ----------------------------------------------------------------------------
if __name__ == "__main__":
    # Module config (mirrors __init__):
    #   cat_cols = ["c0", "c1", "c2"], cat_unique = {c0:10, c1:6, c2:20}
    #   cat_emb_dim=16 -> per-col emb dims: min(16, v//2+1) clamped to >=4
    cat_vocabs = (10, 6, 20)
    cat_dims = tuple(max(min(16, v // 2 + 1), 4) for v in cat_vocabs)  # (6, 4, 11)
    num_dim = 32
    feature_dim = 64
    cat_out_dim = sum(cat_dims)

    B, S = 2, 8
    n_cat = len(cat_vocabs)

    key = jax.random.PRNGKey(0)
    keys = jax.random.split(key, 8 + n_cat)

    # Deterministic parameter init (synthetic weights).
    emb_tables = tuple(
        jax.random.normal(keys[i], (cat_vocabs[i], cat_dims[i]), jnp.float32) * 0.1
        for i in range(n_cat)
    )
    w_num = jax.random.normal(keys[n_cat + 0], (num_dim, num_dim), jnp.float32) * 0.1
    b_num = jax.random.normal(keys[n_cat + 1], (1, num_dim), jnp.float32) * 0.1
    w_out = (
        jax.random.normal(
            keys[n_cat + 2], (cat_out_dim + num_dim, feature_dim), jnp.float32
        )
        * 0.1
    )
    b_out = jax.random.normal(keys[n_cat + 3], (1, feature_dim), jnp.float32) * 0.1

    params = {
        "emb_tables": emb_tables,
        "w_num": w_num,
        "b_num": b_num,
        "w_out": w_out,
        "b_out": b_out,
    }

    # Build input x: first n_cat features are integer category ids (stored as
    # float, as the torch module expects), the rest are numeric features.
    cat_part = jnp.stack(
        [
            jax.random.randint(keys[n_cat + 4 + 0], (B, S), 0, cat_vocabs[0]),
            jax.random.randint(keys[n_cat + 4 + 1], (B, S), 0, cat_vocabs[1]),
            jax.random.randint(keys[n_cat + 4 + 2], (B, S), 0, cat_vocabs[2]),
        ],
        axis=-1,
    ).astype(jnp.float32)
    num_part = jax.random.normal(keys[n_cat + 4 + 3], (B, S, num_dim), jnp.float32)
    x = jnp.concatenate([cat_part, num_part], axis=-1)  # [B, S, n_cat + num_dim]

    out = feature_embedder_forward(
        x, params, cat_vocabs, cat_dims, num_dim, feature_dim
    )
    out = jax.block_until_ready(out)

    ref = feature_embedder_reference(
        x, params, cat_vocabs, cat_dims, num_dim, feature_dim
    )

    assert out.shape == (B, S, feature_dim)
    assert jnp.allclose(out, ref, rtol=1e-4, atol=1e-4), (
        f"max abs err {jnp.max(jnp.abs(out - ref))}"
    )

    print("KERNEL_OK")
</pallas_src>

<mosaic_0001>
module attributes {stable_mosaic.version = 11 : i64} {
  func.func @kernel(%arg0: i32, %arg1: memref<16x35xf32, #tpu.memory_space<vmem>>, %arg2: memref<128x64xf32, #tpu.memory_space<vmem>>, %arg3: memref<35x64xf32, #tpu.memory_space<vmem>>, %arg4: memref<1x64xf32, #tpu.memory_space<vmem>>, %arg5: memref<8x128xf32, #tpu.memory_space<vmem>>) attributes {dimension_semantics = [#tpu.dimension_semantics<parallel>], iteration_bounds = array<i64: 1>, scalar_prefetch = 0 : i64, scratch_operands = 0 : i64, tpu.core_type = #tpu.core_type<tc>, window_params = [{transform_indices = @transform_0, window_bounds = array<i64: 16, 35>}, {pipeline_mode = #tpu.pipeline_mode<synchronous>, transform_indices = @transform_1, window_bounds = array<i64: 128, 64>}, {pipeline_mode = #tpu.pipeline_mode<synchronous>, transform_indices = @transform_2, window_bounds = array<i64: 35, 64>}, {pipeline_mode = #tpu.pipeline_mode<synchronous>, transform_indices = @transform_3, window_bounds = array<i64: 1, 64>}, {transform_indices = @transform_4, window_bounds = array<i64: 8, 128>}]} {
    %c0 = arith.constant 0 : index
    %c0_0 = arith.constant 0 : index
    %0 = vector.load %arg1[%c0, %c0_0] : memref<16x35xf32, #tpu.memory_space<vmem>>, vector<16x35xf32>
    %c0_1 = arith.constant 0 : index
    %c0_2 = arith.constant 0 : index
    %1 = vector.load %arg3[%c0_1, %c0_2] : memref<35x64xf32, #tpu.memory_space<vmem>>, vector<35x64xf32>
    %cst = arith.constant dense<0.000000e+00> : vector<16x64xf32>
    %2 = tpu.matmul %0, %1, %cst {dimension_numbers = #tpu.dot_dimension_numbers<[1], [0], [0], [1], [0, 0, 1, 1], [], []>} : vector<16x35xf32>, vector<35x64xf32>, vector<16x64xf32> -> vector<16x64xf32>
    %3 = tpu.iota {dimensions = array<i32: 1>} : vector<16x128xi32>
    %c0_3 = arith.constant 0 : index
    %c0_4 = arith.constant 0 : index
    %4 = vector.load %arg1[%c0_3, %c0_4] : memref<16x35xf32, #tpu.memory_space<vmem>>, vector<16x1xf32>
    %5 = arith.fptosi %4 : vector<16x1xf32> to vector<16x1xi32>
    %c0_i32 = arith.constant 0 : i32
    %6 = vector.broadcast %c0_i32 : i32 to vector<16x1xi32>
    %7 = arith.addi %5, %6 : vector<16x1xi32>
    %8 = vector.broadcast %7 : vector<16x1xi32> to vector<16x128xi32>
    %9 = arith.cmpi eq, %8, %3 : vector<16x128xi32>
    %c0_5 = arith.constant 0 : index
    %c1 = arith.constant 1 : index
    %10 = vector.load %arg1[%c0_5, %c1] : memref<16x35xf32, #tpu.memory_space<vmem>>, vector<16x1xf32>
    %11 = arith.fptosi %10 : vector<16x1xf32> to vector<16x1xi32>
    %c10_i32 = arith.constant 10 : i32
    %12 = vector.broadcast %c10_i32 : i32 to vector<16x1xi32>
    %13 = arith.addi %11, %12 : vector<16x1xi32>
    %14 = vector.broadcast %13 : vector<16x1xi32> to vector<16x128xi32>
    %15 = arith.cmpi eq, %14, %3 : vector<16x128xi32>
    %16 = arith.ori %9, %15 : vector<16x128xi1>
    %c0_6 = arith.constant 0 : index
    %c2 = arith.constant 2 : index
    %17 = vector.load %arg1[%c0_6, %c2] : memref<16x35xf32, #tpu.memory_space<vmem>>, vector<16x1xf32>
    %18 = arith.fptosi %17 : vector<16x1xf32> to vector<16x1xi32>
    %c16_i32 = arith.constant 16 : i32
    %19 = vector.broadcast %c16_i32 : i32 to vector<16x1xi32>
    %20 = arith.addi %18, %19 : vector<16x1xi32>
    %21 = vector.broadcast %20 : vector<16x1xi32> to vector<16x128xi32>
    %22 = arith.cmpi eq, %21, %3 : vector<16x128xi32>
    %23 = arith.ori %16, %22 : vector<16x128xi1>
    %24 = arith.extui %23 : vector<16x128xi1> to vector<16x128xi32>
    %25 = arith.sitofp %24 : vector<16x128xi32> to vector<16x128xf32>
    %c0_7 = arith.constant 0 : index
    %c0_8 = arith.constant 0 : index
    %26 = vector.load %arg2[%c0_7, %c0_8] : memref<128x64xf32, #tpu.memory_space<vmem>>, vector<128x64xf32>
    %cst_9 = arith.constant dense<0.000000e+00> : vector<16x64xf32>
    %27 = tpu.matmul %25, %26, %cst_9 {dimension_numbers = #tpu.dot_dimension_numbers<[1], [0], [0], [1], [0, 0, 1, 1], [], []>} : vector<16x128xf32>, vector<128x64xf32>, vector<16x64xf32> -> vector<16x64xf32>
    %28 = arith.addf %2, %27 : vector<16x64xf32>
    %c0_10 = arith.constant 0 : index
    %c0_11 = arith.constant 0 : index
    %29 = vector.load %arg4[%c0_10, %c0_11] : memref<1x64xf32, #tpu.memory_space<vmem>>, vector<1x64xf32>
    %30 = vector.broadcast %29 : vector<1x64xf32> to vector<16x64xf32>
    %31 = arith.addf %28, %30 : vector<16x64xf32>
    %32 = vector.shape_cast %31 : vector<16x64xf32> to vector<8x128xf32>
    %c0_12 = arith.constant 0 : index
    %c0_13 = arith.constant 0 : index
    %33 = vector.load %arg5[%c0_12, %c0_13] : memref<8x128xf32, #tpu.memory_space<vmem>>, vector<8x128xf32>
    tpu.vector_store %arg5[%c0_12, %c0_13], %32 {strides = array<i32>} : memref<8x128xf32, #tpu.memory_space<vmem>>, vector<8x128xf32>,
    return
  }
  func.func @transform_0(%arg0: i32) -> (i32, i32) {
    %c0_i32 = arith.constant 0 : i32
    %c0_i32_0 = arith.constant 0 : i32
    return %arg0, %c0_i32 : i32, i32
  }
  func.func @transform_1(%arg0: i32) -> (i32, i32) {
    %c0_i32 = arith.constant 0 : i32
    %c0_i32_0 = arith.constant 0 : i32
    %c0_i32_1 = arith.constant 0 : i32
    return %c0_i32, %c0_i32_0 : i32, i32
  }
  func.func @transform_2(%arg0: i32) -> (i32, i32) {
    %c0_i32 = arith.constant 0 : i32
    %c0_i32_0 = arith.constant 0 : i32
    %c0_i32_1 = arith.constant 0 : i32
    return %c0_i32, %c0_i32_0 : i32, i32
  }
  func.func @transform_3(%arg0: i32) -> (i32, i32) {
    %c0_i32 = arith.constant 0 : i32
    %c0_i32_0 = arith.constant 0 : i32
    %c0_i32_1 = arith.constant 0 : i32
    return %c0_i32, %c0_i32_0 : i32, i32
  }
  func.func @transform_4(%arg0: i32) -> (i32, i32) {
    %c0_i32 = arith.constant 0 : i32
    %c0_i32_0 = arith.constant 0 : i32
    return %arg0, %c0_i32 : i32, i32
  }
}

module attributes {stable_mosaic.version = 11 : i64} {
  func.func @kernel(%arg0: i32, %arg1: memref<16x35xf32, #tpu.memory_space<vmem>>, %arg2: memref<128x64xf32, #tpu.memory_space<vmem>>, %arg3: memref<35x64xf32, #tpu.memory_space<vmem>>, %arg4: memref<1x64xf32, #tpu.memory_space<vmem>>, %arg5: memref<16x64xf32, #tpu.memory_space<vmem>>) attributes {dimension_semantics = [#tpu.dimension_semantics<parallel>], iteration_bounds = array<i64: 1>, scalar_prefetch = 0 : i64, scratch_operands = 0 : i64, tpu.core_type = #tpu.core_type<tc>, window_params = [{transform_indices = @transform_0, window_bounds = array<i64: 16, 35>}, {pipeline_mode = #tpu.pipeline_mode<synchronous>, transform_indices = @transform_1, window_bounds = array<i64: 128, 64>}, {pipeline_mode = #tpu.pipeline_mode<synchronous>, transform_indices = @transform_2, window_bounds = array<i64: 35, 64>}, {pipeline_mode = #tpu.pipeline_mode<synchronous>, transform_indices = @transform_3, window_bounds = array<i64: 1, 64>}, {transform_indices = @transform_4, window_bounds = array<i64: 16, 64>}]} {
    %c0 = arith.constant 0 : index
    %c0_0 = arith.constant 0 : index
    %0 = vector.load %arg1[%c0, %c0_0] : memref<16x35xf32, #tpu.memory_space<vmem>>, vector<16x35xf32>
    %c0_1 = arith.constant 0 : index
    %c0_2 = arith.constant 0 : index
    %1 = vector.load %arg3[%c0_1, %c0_2] : memref<35x64xf32, #tpu.memory_space<vmem>>, vector<35x64xf32>
    %cst = arith.constant dense<0.000000e+00> : vector<16x64xf32>
    %2 = tpu.matmul %0, %1, %cst {dimension_numbers = #tpu.dot_dimension_numbers<[1], [0], [0], [1], [0, 0, 1, 1], [], []>} : vector<16x35xf32>, vector<35x64xf32>, vector<16x64xf32> -> vector<16x64xf32>
    %3 = tpu.iota {dimensions = array<i32: 1>} : vector<16x128xi32>
    %c0_3 = arith.constant 0 : index
    %c0_4 = arith.constant 0 : index
    %4 = vector.load %arg1[%c0_3, %c0_4] : memref<16x35xf32, #tpu.memory_space<vmem>>, vector<16x1xf32>
    %5 = arith.fptosi %4 : vector<16x1xf32> to vector<16x1xi32>
    %c0_i32 = arith.constant 0 : i32
    %6 = vector.broadcast %c0_i32 : i32 to vector<16x1xi32>
    %7 = arith.addi %5, %6 : vector<16x1xi32>
    %8 = vector.broadcast %7 : vector<16x1xi32> to vector<16x128xi32>
    %9 = arith.cmpi eq, %8, %3 : vector<16x128xi32>
    %c0_5 = arith.constant 0 : index
    %c1 = arith.constant 1 : index
    %10 = vector.load %arg1[%c0_5, %c1] : memref<16x35xf32, #tpu.memory_space<vmem>>, vector<16x1xf32>
    %11 = arith.fptosi %10 : vector<16x1xf32> to vector<16x1xi32>
    %c10_i32 = arith.constant 10 : i32
    %12 = vector.broadcast %c10_i32 : i32 to vector<16x1xi32>
    %13 = arith.addi %11, %12 : vector<16x1xi32>
    %14 = vector.broadcast %13 : vector<16x1xi32> to vector<16x128xi32>
    %15 = arith.cmpi eq, %14, %3 : vector<16x128xi32>
    %16 = arith.ori %9, %15 : vector<16x128xi1>
    %c0_6 = arith.constant 0 : index
    %c2 = arith.constant 2 : index
    %17 = vector.load %arg1[%c0_6, %c2] : memref<16x35xf32, #tpu.memory_space<vmem>>, vector<16x1xf32>
    %18 = arith.fptosi %17 : vector<16x1xf32> to vector<16x1xi32>
    %c16_i32 = arith.constant 16 : i32
    %19 = vector.broadcast %c16_i32 : i32 to vector<16x1xi32>
    %20 = arith.addi %18, %19 : vector<16x1xi32>
    %21 = vector.broadcast %20 : vector<16x1xi32> to vector<16x128xi32>
    %22 = arith.cmpi eq, %21, %3 : vector<16x128xi32>
    %23 = arith.ori %16, %22 : vector<16x128xi1>
    %24 = arith.extui %23 : vector<16x128xi1> to vector<16x128xi32>
    %25 = arith.sitofp %24 : vector<16x128xi32> to vector<16x128xf32>
    %c0_7 = arith.constant 0 : index
    %c0_8 = arith.constant 0 : index
    %26 = vector.load %arg2[%c0_7, %c0_8] : memref<128x64xf32, #tpu.memory_space<vmem>>, vector<128x64xf32>
    %cst_9 = arith.constant dense<0.000000e+00> : vector<16x64xf32>
    %27 = tpu.matmul %25, %26, %cst_9 {dimension_numbers = #tpu.dot_dimension_numbers<[1], [0], [0], [1], [0, 0, 1, 1], [], []>} : vector<16x128xf32>, vector<128x64xf32>, vector<16x64xf32> -> vector<16x64xf32>
    %28 = arith.addf %2, %27 : vector<16x64xf32>
    %c0_10 = arith.constant 0 : index
    %c0_11 = arith.constant 0 : index
    %29 = vector.load %arg4[%c0_10, %c0_11] : memref<1x64xf32, #tpu.memory_space<vmem>>, vector<1x64xf32>
    %30 = vector.broadcast %29 : vector<1x64xf32> to vector<16x64xf32>
    %31 = arith.addf %28, %30 : vector<16x64xf32>
    %c0_12 = arith.constant 0 : index
    %c0_13 = arith.constant 0 : index
    %32 = vector.load %arg5[%c0_12, %c0_13] : memref<16x64xf32, #tpu.memory_space<vmem>>, vector<16x64xf32>
    tpu.vector_store %arg5[%c0_12, %c0_13], %31 {strides = array<i32>} : memref<16x64xf32, #tpu.memory_space<vmem>>, vector<16x64xf32>,
    return
  }
  func.func @transform_0(%arg0: i32) -> (i32, i32) {
    %c0_i32 = arith.constant 0 : i32
    %c0_i32_0 = arith.constant 0 : i32
    return %arg0, %c0_i32 : i32, i32
  }
  func.func @transform_1(%arg0: i32) -> (i32, i32) {
    %c0_i32 = arith.constant 0 : i32
    %c0_i32_0 = arith.constant 0 : i32
    %c0_i32_1 = arith.constant 0 : i32
    return %c0_i32, %c0_i32_0 : i32, i32
  }
  func.func @transform_2(%arg0: i32) -> (i32, i32) {
    %c0_i32 = arith.constant 0 : i32
    %c0_i32_0 = arith.constant 0 : i32
    %c0_i32_1 = arith.constant 0 : i32
    return %c0_i32, %c0_i32_0 : i32, i32
  }
  func.func @transform_3(%arg0: i32) -> (i32, i32) {
    %c0_i32 = arith.constant 0 : i32
    %c0_i32_0 = arith.constant 0 : i32
    %c0_i32_1 = arith.constant 0 : i32
    return %c0_i32, %c0_i32_0 : i32, i32
  }
  func.func @transform_4(%arg0: i32) -> (i32, i32) {
    %c0_i32 = arith.constant 0 : i32
    %c0_i32_0 = arith.constant 0 : i32
    return %arg0, %c0_i32 : i32, i32
  }
}

</mosaic_0001>

<llo_original>
// kernel: tpu_custom_call.1
$region0: #{tpu_custom_call.1}
  #allocation0 [shape = 'u32[]', space=smem, size = 0x4, offset = 0x4, fixed_abs, tag = 'smem constant byte address 0x4 - core index']
  #allocation1 [shape = 'u32[144,128]{1,0:T(1,128)}', space=vmem, size = 0x12000, scoped, tag = 'internal scratch']
  %s0 = inlined_call_operand.vmem [shape: f32[16,35], index: 0, kind: input, shape index: {}]
  %s1 = inlined_call_operand.vmem [shape: f32[128,64], index: 1, kind: input, shape index: {}]
  %s2 = inlined_call_operand.vmem [shape: f32[35,64], index: 2, kind: input, shape index: {}]
  %s3 = inlined_call_operand.vmem [shape: f32[1,64], index: 3, kind: input, shape index: {}]
  %s4 = inlined_call_operand.hbm [shape: f32[16,64], index: 4, kind: output, shape index: {}]
  %s5 = sld [smem:[#allocation0]]
  $region26: #{tpu_custom_call.1} parent=0
    _
  %s7 = ssub.s32 1, %s5
  %s8 = scalar_select 0, %s7, %s5
  $region1: #{tpu_custom_call.1} parent=0
    #allocation2 [shape = 'u8[8192]{0}', space=vmem, size = 0x2000, scoped, tag = 'output window, operand 0, single buffered']
    #allocation3 [shape = 's32[1]{0}', space=sflag, size = 0x4, scoped, tag = 'scoped memory for tpu_custom_call.1']
    %9 = vsyncpa [#allocation3], 0
    // Predicated region
    $region2: #{tpu_custom_call.1} parent=1 // pred_check
      _
    $region3: #{tpu_custom_call.1} parent=1 // pred_check_branch
      %11 = sbr.rel (0) target = $region5
    $region4: #{tpu_custom_call.1} parent=1 // pred_region
      _
    $region5: #{tpu_custom_call.1} parent=1 // pred_fallthru
      _
    // Predicated region
    $region6: #{tpu_custom_call.1} parent=1 // pred_check
      _
    $region7: #{tpu_custom_call.1} parent=1 // pred_check_branch
      %13 = sbr.rel (0) target = $region9
    $region8: #{tpu_custom_call.1} parent=1 // pred_region
      _
    $region9: #{tpu_custom_call.1} parent=1 // pred_fallthru
      _
    // Predicated region
    $region10: #{tpu_custom_call.1} parent=1 // pred_check
      _
    $region11: #{tpu_custom_call.1} parent=1 // pred_check_branch
      %15 = sbr.rel (0) target = $region13
    $region12: #{tpu_custom_call.1} parent=1 // pred_region
      _
    $region13: #{tpu_custom_call.1} parent=1 // pred_fallthru
      _
    // Predicated region
    $region14: #{tpu_custom_call.1} parent=1 // pred_check
      _
    $region15: #{tpu_custom_call.1} parent=1 // pred_check_branch
      %17 = sbr.rel (0) target = $region17
    $region16: #{tpu_custom_call.1} parent=1 // pred_region
      _
    $region17: #{tpu_custom_call.1} parent=1 // pred_fallthru
      _
    %v18 = vld [vmem:[%s0] sm:$0xff]
    %v19 = vld [vmem:[%s0 + $0x8] sm:$0xff]
    %v20 = vld [vmem:[%s2] sm:$0xff]
    %v21 = vld [vmem:[%s2 + $0x8] sm:$0xff]
    %v22 = vld [vmem:[%s2 + $0x10] sm:$0xff]
    %v23 = vld [vmem:[%s2 + $0x18] sm:$0xff]
    %v24 = vld [vmem:[%s2 + $0x20] sm:$0x7]
    %v25 = vlaneseq
    %v26 = vand.u32 %v25, 127
    %v27 = vcvt.f32.s32.to.zero.pseudo %v18
    %v28 = vcvt.f32.s32.to.zero.pseudo %v19
    %29 = vset.pattern.permute.xlu0 0
    %30 = vperm.xlu0 %29, %v27
    %v31 = vpop.permute.xlu0 %30
    %32 = vset.pattern.permute.xlu0 0
    %33 = vperm.xlu0 %32, %v28
    %v34 = vpop.permute.xlu0 %33
    %vm35 = vcmp.eq.s32.totalorder %v31, %v26
    %vm36 = vcmp.eq.s32.totalorder %v34, %v26
    %v37 = vadd.s32 %v27, 10
    %v38 = vadd.s32 %v28, 10
    %39 = vset.pattern.permute.xlu0 1
    %40 = vperm.xlu0 %39, %v37
    %v41 = vpop.permute.xlu0 %40
    %42 = vset.pattern.permute.xlu0 1
    %43 = vperm.xlu0 %42, %v38
    %v44 = vpop.permute.xlu0 %43
    %vm45 = vcmp.eq.s32.totalorder %v41, %v26
    %vm46 = vcmp.eq.s32.totalorder %v44, %v26
    %vm47 = vmor %vm35, %vm45
    %vm48 = vmor %vm36, %vm46
    %v49 = vadd.s32 %v27, 16
    %v50 = vadd.s32 %v28, 16
    %51 = vset.pattern.permute.xlu0 2
    %52 = vperm.xlu0 %51, %v49
    %v53 = vpop.permute.xlu0 %52
    %54 = vset.pattern.permute.xlu0 2
    %55 = vperm.xlu0 %54, %v50
    %v56 = vpop.permute.xlu0 %55
    %vm57 = vcmp.eq.s32.totalorder %v53, %v26
    %vm58 = vcmp.eq.s32.totalorder %v56, %v26
    %vm59 = vmor %vm47, %vm57
    %vm60 = vmor %vm48, %vm58
    %v61 = vsel %vm59, 1, 0
    %v62 = vsel %vm60, 1, 0
    %v63 = vcvt.s32.f32 %v61
    %v64 = vcvt.s32.f32 %v62
    %v65 = vld [vmem:[%s1] sm:$0xff]
    %v66 = vld [vmem:[%s1 + $0x8] sm:$0xff]
    %v67 = vld [vmem:[%s1 + $0x10] sm:$0xff]
    %v68 = vld [vmem:[%s1 + $0x18] sm:$0xff]
    %v69 = vld [vmem:[%s1 + $0x20] sm:$0xff]
    %v70 = vld [vmem:[%s1 + $0x28] sm:$0xff]
    %v71 = vld [vmem:[%s1 + $0x30] sm:$0xff]
    %v72 = vld [vmem:[%s1 + $0x38] sm:$0xff]
    %v73 = vld [vmem:[%s1 + $0x40] sm:$0xff]
    %v74 = vld [vmem:[%s1 + $0x48] sm:$0xff]
    %v75 = vld [vmem:[%s1 + $0x50] sm:$0xff]
    %v76 = vld [vmem:[%s1 + $0x58] sm:$0xff]
    %v77 = vld [vmem:[%s1 + $0x60] sm:$0xff]
    %v78 = vld [vmem:[%s1 + $0x68] sm:$0xff]
    %v79 = vld [vmem:[%s1 + $0x70] sm:$0xff]
    %v80 = vld [vmem:[%s1 + $0x78] sm:$0xff]
    %81 = vmatprep.subr.mxu0 0.0
    %82 = vmatpush1.msra.mxu0 %v80
    %83 = vmatprep.subr.mxu0 0.0
    %84 = vmatpush1.msra.mxu0 %v79
    %85 = vmatprep.subr.mxu0 0.0
    %86 = vmatpush1.msra.mxu0 %v78
    %87 = vmatprep.subr.mxu0 0.0
    %88 = vmatpush1.msra.mxu0 %v77
    %89 = vmatprep.subr.mxu0 0.0
    %90 = vmatpush1.msra.mxu0 %v76
    %91 = vmatprep.subr.mxu0 0.0
    %92 = vmatpush1.msra.mxu0 %v75
    %93 = vmatprep.subr.mxu0 0.0
    %94 = vmatpush1.msra.mxu0 %v74
    %95 = vmatprep.subr.mxu0 0.0
    %96 = vmatpush1.msra.mxu0 %v73
    %97 = vmatprep.subr.mxu0 0.0
    %98 = vmatpush1.msra.mxu0 %v72
    %99 = vmatprep.subr.mxu0 0.0
    %100 = vmatpush1.msra.mxu0 %v71
    %101 = vmatprep.subr.mxu0 0.0
    %102 = vmatpush1.msra.mxu0 %v70
    %103 = vmatprep.subr.mxu0 0.0
    %104 = vmatpush1.msra.mxu0 %v69
    %105 = vmatprep.subr.mxu0 0.0
    %106 = vmatpush1.msra.mxu0 %v68
    %107 = vmatprep.subr.mxu0 0.0
    %108 = vmatpush1.msra.mxu0 %v67
    %109 = vmatprep.subr.mxu0 0.0
    %110 = vmatpush1.msra.mxu0 %v66
    %111 = vmatprep.subr.mxu0 0.0
    %112 = vmatpush1.msra.mxu0 %v65
    %113 = vmatprep.subr.mxu0 0.0
    %114 = vmatpush2.msra.mxu0 0.0
    %115 = vmatprep.subr.mxu0 0.0
    %116 = vmatpush2.msra.mxu0 0.0
    %117 = vmatprep.subr.mxu0 0.0
    %118 = vmatpush2.msra.mxu0 0.0
    %119 = vmatprep.subr.mxu0 0.0
    %120 = vmatpush2.msra.mxu0 0.0
    %121 = vmatprep.subr.mxu0 0.0
    %122 = vmatpush2.msra.mxu0 0.0
    %123 = vmatprep.subr.mxu0 0.0
    %124 = vmatpush2.msra.mxu0 0.0
    %125 = vmatprep.subr.mxu0 0.0
    %126 = vmatpush2.msra.mxu0 0.0
    %127 = vmatprep.subr.mxu0 0.0
    %128 = vmatpush2.msra.mxu0 0.0
    %129 = vmatprep.subr.mxu0 0.0
    %130 = vmatpush2.msra.mxu0 0.0
    %131 = vmatprep.subr.mxu0 0.0
    %132 = vmatpush2.msra.mxu0 0.0
    %133 = vmatprep.subr.mxu0 0.0
    %134 = vmatpush2.msra.mxu0 0.0
    %135 = vmatprep.subr.mxu0 0.0
    %136 = vmatpush2.msra.mxu0 0.0
    %137 = vmatprep.subr.mxu0 0.0
    %138 = vmatpush2.msra.mxu0 0.0
    %139 = vmatprep.subr.mxu0 0.0
    %140 = vmatpush2.msra.mxu0 0.0
    %141 = vmatprep.subr.mxu0 0.0
    %142 = vmatpush2.msra.mxu0 0.0
    %143 = vmatprep.subr.mxu0 0.0
    %144 = vmatpush2.msra.mxu0 0.0
    %145 = vmatprep.mubr.f32.mxu0 0.0
    %146 = vmatmul.mubr.f32.gmra.mxu0 %v63
    %v147 = vpop.f32.mrf.mxu0
    %v148 = vadd.f32 0.0, %v147
    %v149 = vpop.f32.mrf.mxu0
    %150 = vmatprep.mubr.f32.mxu0 0.0
    %151 = vmatmul.mubr.f32.gmra.mxu0 %v64
    %v152 = vpop.f32.mrf.mxu0
    %v153 = vadd.f32 0.0, %v152
    %v154 = vpop.f32.mrf.mxu0
    %155 = vdwg.mxu0
    %vm156 = vcmask 285696
    %v158 = vsel %vm156, %v18, 0
    %v161 = vsel %vm156, %v19, 0
    %vm163 = vcmask 1042432
    %v165 = vsel %vm163, %v24, 0
    %167 = vmatprep.subr.mxu0 0.0
    %168 = vmatpush1.msra.mxu0 0.0
    %169 = vmatprep.subr.mxu0 0.0
    %170 = vmatpush1.msra.mxu0 0.0
    %171 = vmatprep.subr.mxu0 0.0
    %172 = vmatpush1.msra.mxu0 0.0
    %173 = vmatprep.subr.mxu0 0.0
    %174 = vmatpush1.msra.mxu0 0.0
    %175 = vmatprep.subr.mxu0 0.0
    %176 = vmatpush1.msra.mxu0 0.0
    %177 = vmatprep.subr.mxu0 0.0
    %178 = vmatpush1.msra.mxu0 0.0
    %179 = vmatprep.subr.mxu0 0.0
    %180 = vmatpush1.msra.mxu0 0.0
    %181 = vmatprep.subr.mxu0 0.0
    %182 = vmatpush1.msra.mxu0 0.0
    %183 = vmatprep.subr.mxu0 0.0
    %184 = vmatpush1.msra.mxu0 0.0
    %185 = vmatprep.subr.mxu0 0.0
    %186 = vmatpush1.msra.mxu0 0.0
    %187 = vmatprep.subr.mxu0 0.0
    %188 = vmatpush1.msra.mxu0 0.0
    %189 = vmatprep.subr.mxu0 0.0
    %190 = vmatpush1.msra.mxu0 %v165
    %191 = vmatprep.subr.mxu0 0.0
    %192 = vmatpush1.msra.mxu0 %v23
    %193 = vmatprep.subr.mxu0 0.0
    %194 = vmatpush1.msra.mxu0 %v22
    %195 = vmatprep.subr.mxu0 0.0
    %196 = vmatpush1.msra.mxu0 %v21
    %197 = vmatprep.subr.mxu0 0.0
    %198 = vmatpush1.msra.mxu0 %v20
    %199 = vmatprep.subr.mxu0 0.0
    %200 = vmatpush2.msra.mxu0 0.0
    %201 = vmatprep.subr.mxu0 0.0
    %202 = vmatpush2.msra.mxu0 0.0
    %203 = vmatprep.subr.mxu0 0.0
    %204 = vmatpush2.msra.mxu0 0.0
    %205 = vmatprep.subr.mxu0 0.0
    %206 = vmatpush2.msra.mxu0 0.0
    %207 = vmatprep.subr.mxu0 0.0
    %208 = vmatpush2.msra.mxu0 0.0
    %209 = vmatprep.subr.mxu0 0.0
    %210 = vmatpush2.msra.mxu0 0.0
    %211 = vmatprep.subr.mxu0 0.0
    %212 = vmatpush2.msra.mxu0 0.0
    %213 = vmatprep.subr.mxu0 0.0
    %214 = vmatpush2.msra.mxu0 0.0
    %215 = vmatprep.subr.mxu0 0.0
    %216 = vmatpush2.msra.mxu0 0.0
    %217 = vmatprep.subr.mxu0 0.0
    %218 = vmatpush2.msra.mxu0 0.0
    %219 = vmatprep.subr.mxu0 0.0
    %220 = vmatpush2.msra.mxu0 0.0
    %221 = vmatprep.subr.mxu0 0.0
    %222 = vmatpush2.msra.mxu0 0.0
    %223 = vmatprep.subr.mxu0 0.0
    %224 = vmatpush2.msra.mxu0 0.0
    %225 = vmatprep.subr.mxu0 0.0
    %226 = vmatpush2.msra.mxu0 0.0
    %227 = vmatprep.subr.mxu0 0.0
    %228 = vmatpush2.msra.mxu0 0.0
    %229 = vmatprep.subr.mxu0 0.0
    %230 = vmatpush2.msra.mxu0 0.0
    %231 = vmatprep.mubr.f32.mxu0 0.0
    %232 = vmatmul.mubr.f32.gmra.mxu0 %v158
    %v233 = vpop.f32.mrf.mxu0
    %v234 = vadd.f32 %v148, %v233
    %v235 = vpop.f32.mrf.mxu0
    %236 = vmatprep.mubr.f32.mxu0 0.0
    %237 = vmatmul.mubr.f32.gmra.mxu0 %v161
    %v238 = vpop.f32.mrf.mxu0
    %v239 = vadd.f32 %v153, %v238
    %v240 = vpop.f32.mrf.mxu0
    %241 = vdwg.mxu0
    %v242 = vld [vmem:[%s3] sm:$0x1]
    %v244 = vlaneseq
    %v245 = vshrl.u32 %v244, 7
    %v246 = vsub.s32 0, %v245
    %v247 = vrot.slane %v242, %v246
    %v249 = vadd.f32 %v234, %v247
    %v250 = vadd.f32 %v239, %v247
    %vm251 = vcmask 523264
    %252 = vst.msk [vmem:[#allocation2] sm:$0xff] %vm251, %v249
    %253 = vst.msk [vmem:[#allocation2 + $0x8] sm:$0xff] %vm251, %v250
    // Predicated region
    $region18: #{tpu_custom_call.1} parent=1 // pred_check
      _
    $region19: #{tpu_custom_call.1} parent=1 // pred_check_branch
      %255 = sbr.rel (0) target = $region21
    $region20: #{tpu_custom_call.1} parent=1 // pred_region
      %s257 = ssub.s32 256, 256
      %258 = vsyncadd [#allocation3], %s257
      %s259 = sshll.u32 [#allocation2], 4
      %s260 = int_to_ptr.vmem [resolvable:$true] %s259
      %265 = dma.vmem_to_hbm [thread:$0]  %s260, 256, %s4, [#allocation3], 128, 128, 8
    $region21: #{tpu_custom_call.1} parent=1 // pred_fallthru
      _
    // Predicated region
    $region22: #{tpu_custom_call.1} parent=1 // pred_check
      _
    $region23: #{tpu_custom_call.1} parent=1 // pred_check_branch
      %267 = sbr.rel (0) target = $region25
    $region24: #{tpu_custom_call.1} parent=1 // pred_region
      %268 = dma.done [#allocation3], 256
    $region25: #{tpu_custom_call.1} parent=1 // pred_fallthru
      _
    %269 = vsyncpa [#allocation3], 1

</llo_original>
